<compile_context>
chip_gen: v7x
topology: tpu7x:2x2x1
jax: 0.10.0
libtpu: 0.0.40
codegen_flags: <defaults>
</compile_context>

<pallas_src>
import jax
import jax.numpy as jnp
import numpy as np
from jax import lax
from jax.experimental import pallas as pl
from jax.experimental.pallas import tpu as pltpu


def _cdiv(a, b):
    return -(-a // b)


def _round_up(x, m):
    return _cdiv(x, m) * m


# ----------------------------------------------------------------------------
# Synthetic stand-in for the probed intermediate layers of model_A / model_B:
# a 1x1 conv + ReLU, flattened per example in NHWC order.  Kept as a plain
# XLA op: its output width (F=8/16) is lane-sparse (<128 lanes), so a
# dedicated Pallas kernel would waste the MXU/store lanes; linear CKA is
# invariant to feature-column permutations so the NHWC flatten order is fine.
# ----------------------------------------------------------------------------
def feature_projection(x_nchw, w):
    """x_nchw: (N, C, H, W) f32; w: (C, F) f32 -> (N, H*W*F) f32."""
    N, C, H, W = x_nchw.shape
    F = w.shape[1]
    y = jnp.maximum(jnp.einsum("nchw,cf->nhwf", x_nchw, w), 0.0)
    return y.reshape(N, H * W * F)


# ----------------------------------------------------------------------------
# Fused CKA kernel: per-tile column centering + Gram accumulation for BOTH
# feature matrices + CKA combine, all in one pallas_call.
#   CKA = <K, L>_F / (sqrt(<K, K>_F) * sqrt(<L, L>_F)),  K = Xc Xc^T, L = Yc Yc^T
# The grid axis is the shared feature-dim reduction; the Gram accumulator(s)
# live only in VMEM scratch; the only HBM output is the (1,1) CKA scalar.
# ----------------------------------------------------------------------------
def _make_cka_kernel(n, d_a, d_b, ta, tb, steps, stacked, compute_dtype):
    exact_a = (steps * ta == d_a)
    exact_b = (steps * tb == d_b)

    def kernel(fa_ref, fb_ref, o_ref, *acc_refs):
        step = pl.program_id(0)

        @pl.when(step == 0)
        def _init():
            for acc in acc_refs:
                acc[...] = jnp.zeros_like(acc)

        fa = fa_ref[...]
        fb = fb_ref[...]

        # Mask the ragged / out-of-range part of a tile in-kernel, so the
        # wrapper never materializes a zero-padded copy of the features in HBM.
        if not exact_a:
            valid_a = d_a - step * ta          # may be <= 0 for clamped blocks
            col_a = lax.broadcasted_iota(jnp.int32, fa.shape, 1)
            fa = jnp.where(col_a < valid_a, fa, 0.0)
        if not exact_b:
            valid_b = d_b - step * tb
            col_b = lax.broadcasted_iota(jnp.int32, fb.shape, 1)
            fb = jnp.where(col_b < valid_b, fb, 0.0)

        # Column-center this feature tile.  Correct only because every block
        # spans all n rows (asserted structurally in the wrapper); masked /
        # zero-padded columns have zero mean and stay zero.
        fac = fa - jnp.mean(fa, axis=0, keepdims=True)
        fbc = fb - jnp.mean(fb, axis=0, keepdims=True)

        # "Xc @ Xc.T" expressed as a contraction over dim 1 so the MXU
        # consumes the second operand natively (no XLU transpose / copy).
        dn = (((1,), (1,)), ((), ()))
        if stacked:
            # Small-n path: ONE (2n, w) operand -> a single MXU issue/drain
            # per step producing the joint Gram [[K, .], [., L]].
            w = max(ta, tb)
            if ta < w:
                fac = jnp.concatenate(
                    [fac, jnp.zeros((n, w - ta), fac.dtype)], axis=1)
            if tb < w:
                fbc = jnp.concatenate(
                    [fbc, jnp.zeros((n, w - tb), fbc.dtype)], axis=1)
            xy = jnp.concatenate([fac, fbc], axis=0).astype(compute_dtype)
            acc_refs[0][...] += lax.dot_general(
                xy, xy, dimension_numbers=dn,
                preferred_element_type=jnp.float32)
        else:
            fac = fac.astype(compute_dtype)
            fbc = fbc.astype(compute_dtype)
            acc_refs[0][...] += lax.dot_general(
                fac, fac, dimension_numbers=dn,
                preferred_element_type=jnp.float32)
            acc_refs[1][...] += lax.dot_general(
                fbc, fbc, dimension_numbers=dn,
                preferred_element_type=jnp.float32)

        # Final step: CKA combine folded into the same kernel (no Gram HBM
        # round-trip, no extra pallas_call).
        @pl.when(step == pl.num_programs(0) - 1)
        def _finalize():
            if stacked:
                g = acc_refs[0][...]
                ka = g[:n, :n]
                kb = g[n:, n:]
            else:
                ka = acc_refs[0][...]
                kb = acc_refs[1][...]
            hsic_xy = jnp.sum(ka * kb)
            hsic_xx = jnp.sum(ka * ka)
            hsic_yy = jnp.sum(kb * kb)
            # sqrt each factor separately: the product of two 4th-power-scale
            # HSIC terms can overflow/underflow f32 before the sqrt.
            # NOTE: zero-variance features give denom == 0 -> NaN, matching
            # the unguarded reference definition.
            denom = jnp.sqrt(hsic_xx) * jnp.sqrt(hsic_yy)
            o_ref[...] = jnp.reshape(hsic_xy / denom, (1, 1))

    return kernel


def _vmem_footprint_bytes(n, ta, tb, stacked, compute_dtype, in_buffers):
    """Corrected VMEM estimate: pipelined input buffers + centered temps +
    bf16 copies + matmul result temp(s) + accumulator(s) + output block."""
    f32 = 4
    msz = jnp.dtype(compute_dtype).itemsize
    total = in_buffers * n * (ta + tb) * f32        # pipelined input buffers
    total += n * (ta + tb) * f32                    # centered temporaries
    if msz != f32:
        total += n * (ta + tb) * msz                # bf16 copies fed to MXU
    if stacked:
        w = max(ta, tb)
        total += 2 * n * w * msz                    # stacked (2n, w) operand
        total += 2 * (2 * n) * (2 * n) * f32        # joint Gram acc + mm temp
    else:
        total += 4 * n * n * f32                    # 2 accs + 2 mm temps
    total += 2 * 128 * f32                          # (1,1) output block (padded)
    return total


def _choose_tiling(n, d_a, d_b, stacked, compute_dtype, budget, max_tile_d):
    """Largest lane-dense tiles (fewest grid steps) that fit the VMEM budget."""
    max_d = max(d_a, d_b)
    steps = 1 if max_tile_d is None else max(1, _cdiv(max_d, max_tile_d))
    while True:
        ta = _round_up(_cdiv(d_a, steps), 128)
        tb = _round_up(_cdiv(d_b, steps), 128)
        in_buffers = 3 if steps >= 3 else 2
        fp = _vmem_footprint_bytes(n, ta, tb, stacked, compute_dtype, in_buffers)
        if fp <= budget or (ta == 128 and tb == 128):
            return steps, ta, tb, in_buffers, fp
        steps += 1


def _input_spec(block_shape, index_map, buffers):
    """Input BlockSpec; requests deeper (triple) buffering for multi-step
    reductions where DMA issue latency is exposed, with graceful fallback."""
    if buffers > 2:
        try:
            return pl.BlockSpec(block_shape, index_map,
                                pipeline_mode=pl.Buffered(buffers))
        except Exception:   # older Pallas without pipeline_mode / Buffered
            pass
    return pl.BlockSpec(block_shape, index_map)


def cka_linear(feat_a, feat_b, *, compute_dtype=None, max_tile_d=None):
    """feat_a: (n, d_a) f32, feat_b: (n, d_b) f32 -> (1, 1) f32 linear CKA."""
    n, d_a = feat_a.shape
    n_b, d_b = feat_b.shape
    assert n == n_b, "both feature matrices must have the same batch size"

    # bf16 MXU feed (f32 accumulation) once the kernel is compute-bound;
    # exact f32 feed at small n where it is launch/DMA bound anyway.
    if compute_dtype is None:
        compute_dtype = jnp.bfloat16 if n >= 256 else jnp.float32

    # Small-n path: stack [Ac; Bc] and do ONE MXU contraction per step (the
    # systolic array is <1% occupied at n=8; the redundant cross-block FLOPs
    # are free and the MXU issue/drain count is halved).
    stacked = (2 * n <= 256) and (n % 8 == 0)

    # Generation-aware VMEM budget (128 MiB on v5e/v6e, 64 MiB on v7x).
    try:
        vmem_cap = int(pltpu.get_tpu_info().vmem_capacity_bytes)
        if vmem_cap <= 0:
            raise ValueError(vmem_cap)
    except Exception:
        vmem_cap = 64 * 1024 * 1024        # conservative fallback (v7x size)
    budget = int(vmem_cap * 0.6)           # headroom for compiler scratch

    steps, ta, tb, in_buffers, fp = _choose_tiling(
        n, d_a, d_b, stacked, compute_dtype, budget, max_tile_d)
    if fp > budget:
        raise ValueError(
            f"CKA Gram for batch size n={n} does not fit the VMEM budget "
            f"({fp} > {budget} bytes); reduce n or compute the Gram in HBM.")

    blocks_a = _cdiv(d_a, ta)
    blocks_b = _cdiv(d_b, tb)
    # Clamp the block index of the narrower matrix once its columns are
    # exhausted (the contribution is masked to zero in-kernel) instead of
    # inflating it with DMA'd zero columns.
    a_map = (lambda k: (0, k)) if blocks_a == steps else (
        lambda k: (0, jnp.minimum(k, blocks_a - 1)))
    b_map = (lambda k: (0, k)) if blocks_b == steps else (
        lambda k: (0, jnp.minimum(k, blocks_b - 1)))

    # Structural guarantee required for per-tile column centering: every
    # block spans all n rows.
    block_a, block_b = (n, ta), (n, tb)
    assert block_a[0] == n and block_b[0] == n

    kernel = _make_cka_kernel(n, d_a, d_b, ta, tb, steps, stacked, compute_dtype)

    if stacked:
        scratch = [pltpu.VMEM((2 * n, 2 * n), jnp.float32)]   # joint Gram acc
    else:
        scratch = [pltpu.VMEM((n, n), jnp.float32),           # Gram acc (A)
                   pltpu.VMEM((n, n), jnp.float32)]           # Gram acc (B)

    vmem_limit = min(int(vmem_cap * 0.8), 100 * 1024 * 1024)

    return pl.pallas_call(
        kernel,
        out_shape=jax.ShapeDtypeStruct((1, 1), jnp.float32),
        grid_spec=pltpu.PrefetchScalarGridSpec(
            num_scalar_prefetch=0,
            grid=(steps,),
            in_specs=[_input_spec(block_a, a_map, in_buffers),
                      _input_spec(block_b, b_map, in_buffers)],
            out_specs=pl.BlockSpec((1, 1), lambda k: (0, 0)),
            scratch_shapes=scratch,
        ),
        compiler_params=pltpu.CompilerParams(
            dimension_semantics=("arbitrary",),
            vmem_limit_bytes=vmem_limit,
        ),
    )(feat_a, feat_b)


# TODO(synk): config.CKA['kernel'] may select an RBF kernel; only linear CKA
# is implemented here.
# TODO(synk): the torch.save / os.makedirs activation-dump loop in forward()
# is file I/O with no Pallas equivalent and is intentionally not reproduced.
# TODO(synk): the real model_A / model_B feature extractors are external
# networks; a deterministic 1x1-conv + ReLU stand-in is used instead.


def cka_reference(fa, fb):
    """Pure-JAX reference for the linear CKA computed by the fused kernel."""
    fa = fa - fa.mean(0, keepdims=True)
    fb = fb - fb.mean(0, keepdims=True)
    k = fa @ fa.T
    l = fb @ fb.T
    return jnp.sum(k * l) / jnp.sqrt(jnp.sum(k * k) * jnp.sum(l * l))


if __name__ == "__main__":
    key = jax.random.PRNGKey(0)
    k_x, k_wa, k_wb, k_a2, k_b2, k_a3, k_b3 = jax.random.split(key, 7)

    # ---- Case 1: the module's forward path at toy shapes (stacked-Gram) ----
    N, C, H, W = 8, 4, 8, 8
    F_A, F_B = 8, 16     # output channels of model_A / model_B probed layers
    x = jax.random.normal(k_x, (N, C, H, W), dtype=jnp.float32)
    w_a = 0.1 * jax.random.normal(k_wa, (C, F_A), dtype=jnp.float32)
    w_b = 0.1 * jax.random.normal(k_wb, (C, F_B), dtype=jnp.float32)

    feat_a = feature_projection(x, w_a)   # (8, 512)
    feat_b = feature_projection(x, w_b)   # (8, 1024)

    cka = jax.block_until_ready(cka_linear(feat_a, feat_b))
    ref = cka_reference(feat_a, feat_b)
    np.testing.assert_allclose(np.asarray(cka)[0, 0], np.asarray(ref),
                               rtol=1e-4, atol=1e-5)

    # ---- Case 2: larger n -> bf16 MXU feed, separate Gram accumulators -----
    n2, da2, db2 = 256, 768, 512
    fa2 = jax.random.normal(k_a2, (n2, da2), dtype=jnp.float32)
    fb2 = jax.random.normal(k_b2, (n2, db2), dtype=jnp.float32)
    cka2 = jax.block_until_ready(cka_linear(fa2, fb2))
    ref2 = cka_reference(fa2, fb2)
    np.testing.assert_allclose(np.asarray(cka2)[0, 0], np.asarray(ref2),
                               rtol=2e-2, atol=2e-2)

    # ---- Case 3: ragged feature dims (not multiples of 128), multi-step ----
    # Exercises in-kernel masking, clamped block indices and deeper buffering.
    n3, da3, db3 = 16, 200, 520
    fa3 = jax.random.normal(k_a3, (n3, da3), dtype=jnp.float32)
    fb3 = jax.random.normal(k_b3, (n3, db3), dtype=jnp.float32)
    cka3 = jax.block_until_ready(cka_linear(fa3, fb3, max_tile_d=256))
    ref3 = cka_reference(fa3, fb3)
    np.testing.assert_allclose(np.asarray(cka3)[0, 0], np.asarray(ref3),
                               rtol=1e-4, atol=1e-5)

    print("KERNEL_OK")
</pallas_src>

<mosaic_0001>
module attributes {stable_mosaic.version = 11 : i64} {
  func.func @kernel(%arg0: i32, %arg1: memref<8x512xf32, #tpu.memory_space<vmem>>, %arg2: memref<8x1024xf32, #tpu.memory_space<vmem>>, %arg3: memref<1x1xf32, #tpu.memory_space<vmem>>, %arg4: memref<16x16xf32, #tpu.memory_space<vmem>>) attributes {dimension_semantics = [#tpu.dimension_semantics<arbitrary>], iteration_bounds = array<i64: 1>, scalar_prefetch = 0 : i64, scratch_operands = 1 : i64, tpu.core_type = #tpu.core_type<tc>, window_params = [{transform_indices = @transform_0, window_bounds = array<i64: 8, 512>}, {transform_indices = @transform_1, window_bounds = array<i64: 8, 1024>}, {pipeline_mode = #tpu.pipeline_mode<synchronous>, transform_indices = @transform_2, window_bounds = array<i64: 1, 1>}]} {
    %c0_i32 = arith.constant 0 : i32
    %0 = arith.cmpi eq, %arg0, %c0_i32 : i32
    %1 = arith.extui %0 : i1 to i32
    %c0_i32_0 = arith.constant 0 : i32
    %2 = arith.cmpi ne, %1, %c0_i32_0 : i32
    scf.if %2 {
      %cst_15 = arith.constant 0.000000e+00 : f32
      %27 = vector.broadcast %cst_15 : f32 to vector<16x16xf32>
      %c0_16 = arith.constant 0 : index
      %c0_17 = arith.constant 0 : index
      %28 = vector.load %arg4[%c0_16, %c0_17] : memref<16x16xf32, #tpu.memory_space<vmem>>, vector<16x16xf32>
      tpu.vector_store %arg4[%c0_16, %c0_17], %27 {strides = array<i32>} : memref<16x16xf32, #tpu.memory_space<vmem>>, vector<16x16xf32>,
    } else {
    }
    %c0 = arith.constant 0 : index
    %c0_1 = arith.constant 0 : index
    %3 = vector.load %arg1[%c0, %c0_1] : memref<8x512xf32, #tpu.memory_space<vmem>>, vector<8x512xf32>
    %c0_2 = arith.constant 0 : index
    %c0_3 = arith.constant 0 : index
    %4 = vector.load %arg2[%c0_2, %c0_3] : memref<8x1024xf32, #tpu.memory_space<vmem>>, vector<8x1024xf32>
    %cst = arith.constant dense<0.000000e+00> : vector<512xf32>
    %5 = vector.multi_reduction <add>, %3, %cst [0] : vector<8x512xf32> to vector<512xf32>
    %6 = vector.shape_cast %5 : vector<512xf32> to vector<1x512xf32>
    %cst_4 = arith.constant 8.000000e+00 : f32
    %7 = vector.broadcast %cst_4 : f32 to vector<1x512xf32>
    %8 = arith.divf %6, %7 : vector<1x512xf32>
    %9 = vector.broadcast %8 : vector<1x512xf32> to vector<8x512xf32>
    %10 = arith.subf %3, %9 : vector<8x512xf32>
    %cst_5 = arith.constant dense<0.000000e+00> : vector<1024xf32>
    %11 = vector.multi_reduction <add>, %4, %cst_5 [0] : vector<8x1024xf32> to vector<1024xf32>
    %12 = vector.shape_cast %11 : vector<1024xf32> to vector<1x1024xf32>
    %cst_6 = arith.constant 8.000000e+00 : f32
    %13 = vector.broadcast %cst_6 : f32 to vector<1x1024xf32>
    %14 = arith.divf %12, %13 : vector<1x1024xf32>
    %15 = vector.broadcast %14 : vector<1x1024xf32> to vector<8x1024xf32>
    %16 = arith.subf %4, %15 : vector<8x1024xf32>
    %cst_7 = arith.constant 0.000000e+00 : f32
    %17 = vector.broadcast %cst_7 : f32 to vector<8x512xf32>
    %18 = tpu.concatenate %10, %17 in 1 : vector<8x512xf32>, vector<8x512xf32> -> vector<8x1024xf32>
    %19 = tpu.concatenate %18, %16 in 0 : vector<8x1024xf32>, vector<8x1024xf32> -> vector<16x1024xf32>
    %c0_8 = arith.constant 0 : index
    %c0_9 = arith.constant 0 : index
    %20 = vector.load %arg4[%c0_8, %c0_9] : memref<16x16xf32, #tpu.memory_space<vmem>>, vector<16x16xf32>
    %cst_10 = arith.constant dense<0.000000e+00> : vector<16x16xf32>
    %21 = tpu.matmul %19, %19, %cst_10 {dimension_numbers = #tpu.dot_dimension_numbers<[1], [1], [0], [0], [0, 0, 1, 0], [], []>} : vector<16x1024xf32>, vector<16x1024xf32>, vector<16x16xf32> -> vector<16x16xf32>
    %22 = arith.addf %20, %21 : vector<16x16xf32>
    %c0_11 = arith.constant 0 : index
    %c0_12 = arith.constant 0 : index
    %23 = vector.load %arg4[%c0_11, %c0_12] : memref<16x16xf32, #tpu.memory_space<vmem>>, vector<16x16xf32>
    tpu.vector_store %arg4[%c0_11, %c0_12], %22 {strides = array<i32>} : memref<16x16xf32, #tpu.memory_space<vmem>>, vector<16x16xf32>,
    %c0_i32_13 = arith.constant 0 : i32
    %24 = arith.cmpi eq, %arg0, %c0_i32_13 : i32
    %25 = arith.extui %24 : i1 to i32
    %c0_i32_14 = arith.constant 0 : i32
    %26 = arith.cmpi ne, %25, %c0_i32_14 : i32
    scf.if %26 {
      %c0_15 = arith.constant 0 : index
      %c0_16 = arith.constant 0 : index
      %27 = vector.load %arg4[%c0_15, %c0_16] : memref<16x16xf32, #tpu.memory_space<vmem>>, vector<16x16xf32>
      %28 = vector.extract_strided_slice %27 {offsets = [0, 0], sizes = [8, 8], strides = [1, 1]} : vector<16x16xf32> to vector<8x8xf32>
      %29 = vector.extract_strided_slice %27 {offsets = [8, 8], sizes = [8, 8], strides = [1, 1]} : vector<16x16xf32> to vector<8x8xf32>
      %30 = arith.mulf %28, %29 : vector<8x8xf32>
      %31 = vector.shape_cast %30 : vector<8x8xf32> to vector<1x8x8xf32>
      %cst_17 = arith.constant dense<0.000000e+00> : vector<1xf32>
      %32 = vector.multi_reduction <add>, %31, %cst_17 [1, 2] : vector<1x8x8xf32> to vector<1xf32>
      %33 = vector.shape_cast %32 : vector<1xf32> to vector<1x1x1xf32>
      %34 = vector.extract %33[0, 0, 0] : f32 from vector<1x1x1xf32>
      %35 = arith.mulf %28, %28 : vector<8x8xf32>
      %36 = vector.shape_cast %35 : vector<8x8xf32> to vector<1x8x8xf32>
      %cst_18 = arith.constant dense<0.000000e+00> : vector<1xf32>
      %37 = vector.multi_reduction <add>, %36, %cst_18 [1, 2] : vector<1x8x8xf32> to vector<1xf32>
      %38 = vector.shape_cast %37 : vector<1xf32> to vector<1x1x1xf32>
      %39 = vector.extract %38[0, 0, 0] : f32 from vector<1x1x1xf32>
      %40 = arith.mulf %29, %29 : vector<8x8xf32>
      %41 = vector.shape_cast %40 : vector<8x8xf32> to vector<1x8x8xf32>
      %cst_19 = arith.constant dense<0.000000e+00> : vector<1xf32>
      %42 = vector.multi_reduction <add>, %41, %cst_19 [1, 2] : vector<1x8x8xf32> to vector<1xf32>
      %43 = vector.shape_cast %42 : vector<1xf32> to vector<1x1x1xf32>
      %44 = vector.extract %43[0, 0, 0] : f32 from vector<1x1x1xf32>
      %45 = math.sqrt %39 : f32
      %46 = math.sqrt %44 : f32
      %47 = arith.mulf %45, %46 : f32
      %48 = arith.divf %34, %47 : f32
      %49 = vector.broadcast %48 : f32 to vector<1x1xf32>
      %c0_20 = arith.constant 0 : index
      %c0_21 = arith.constant 0 : index
      %50 = vector.load %arg3[%c0_20, %c0_21] : memref<1x1xf32, #tpu.memory_space<vmem>>, vector<1x1xf32>
      tpu.vector_store %arg3[%c0_20, %c0_21], %49 {strides = array<i32>} : memref<1x1xf32, #tpu.memory_space<vmem>>, vector<1x1xf32>,
    } else {
    }
    return
  }
  func.func @transform_0(%arg0: i32) -> (i32, i32) {
    %c0_i32 = arith.constant 0 : i32
    %c0_i32_0 = arith.constant 0 : i32
    return %c0_i32, %arg0 : i32, i32
  }
  func.func @transform_1(%arg0: i32) -> (i32, i32) {
    %c0_i32 = arith.constant 0 : i32
    %c0_i32_0 = arith.constant 0 : i32
    return %c0_i32, %arg0 : i32, i32
  }
  func.func @transform_2(%arg0: i32) -> (i32, i32) {
    %c0_i32 = arith.constant 0 : i32
    %c0_i32_0 = arith.constant 0 : i32
    %c0_i32_1 = arith.constant 0 : i32
    return %c0_i32, %c0_i32_0 : i32, i32
  }
}

</mosaic_0001>

<llo_original>
// kernel: tpu_custom_call.1
$region0: #{tpu_custom_call.1}
  #allocation0 [shape = 'u32[]', space=smem, size = 0x4, offset = 0x4, fixed_abs, tag = 'smem constant byte address 0x4 - core index']
  #allocation1 [shape = 'u32[144,128]{1,0:T(1,128)}', space=vmem, size = 0x12000, scoped, tag = 'internal scratch']
  #allocation2 [shape = 'f32[16,16]{1,0:T(8,128)}', space=vmem, size = 0x2000, scoped, tag = 'scratch operand']
  %s0 = inlined_call_operand.hbm [shape: f32[8,512], index: 0, kind: input, shape index: {}]
  %s1 = inlined_call_operand.hbm [shape: f32[8,1024], index: 1, kind: input, shape index: {}]
  %s2 = inlined_call_operand.hbm [shape: f32[1,1], index: 2, kind: output, shape index: {}]
  %s3 = sld [smem:[#allocation0]]
  $region34: #{tpu_custom_call.1} parent=0
    _
  %s5 = ssub.s32 1, %s3
  %s6 = scalar_select 0, %s5, %s3
  $region1: #{tpu_custom_call.1} parent=0
    #allocation3 [shape = 'u8[16384]{0}', space=vmem, size = 0x4000, scoped, tag = 'input window, operand 0, single buffered']
    #allocation4 [shape = 's32[1]{0}', space=sflag, size = 0x4, scoped, tag = 'scoped memory for tpu_custom_call.1']
    #allocation5 [shape = 's32[1]{0}', space=sflag, size = 0x4, scoped, tag = 'scoped memory for tpu_custom_call.1']
    #allocation6 [shape = 'u8[32768]{0}', space=vmem, size = 0x8000, scoped, tag = 'input window, operand 1, single buffered']
    #allocation7 [shape = 's32[1]{0}', space=sflag, size = 0x4, scoped, tag = 'scoped memory for tpu_custom_call.1']
    #allocation8 [shape = 'u8[512]{0}', space=vmem, size = 0x400, scoped, tag = 'output window, operand 0, single buffered']
    %7 = vsyncpa [#allocation4], 0
    %8 = vsyncpa [#allocation7], 0
    %9 = vsyncpa [#allocation5], 0
    // Predicated region
    $region2: #{tpu_custom_call.1} parent=1 // pred_check
      _
    $region3: #{tpu_custom_call.1} parent=1 // pred_check_branch
      %11 = sbr.rel (0) target = $region5
    $region4: #{tpu_custom_call.1} parent=1 // pred_region
      %s13 = ssub.s32 512, 512
      %14 = vsyncadd [#allocation4], %s13
      %s16 = sshll.u32 [#allocation3], 4
      %s17 = int_to_ptr.vmem [resolvable:$true] %s16
      %19 = dma.hbm_to_vmem [thread:$0]  %s0, 512, %s17, [#allocation4]
    $region5: #{tpu_custom_call.1} parent=1 // pred_fallthru
      _
    // Predicated region
    $region6: #{tpu_custom_call.1} parent=1 // pred_check
      _
    $region7: #{tpu_custom_call.1} parent=1 // pred_check_branch
      %21 = sbr.rel (0) target = $region9
    $region8: #{tpu_custom_call.1} parent=1 // pred_region
      %s23 = ssub.s32 1024, 1024
      %24 = vsyncadd [#allocation7], %s23
      %s26 = sshll.u32 [#allocation6], 4
      %s27 = int_to_ptr.vmem [resolvable:$true] %s26
      %29 = dma.hbm_to_vmem [thread:$0]  %s1, 1024, %s27, [#allocation7]
    $region9: #{tpu_custom_call.1} parent=1 // pred_fallthru
      _
    // Predicated region
    $region10: #{tpu_custom_call.1} parent=1 // pred_check
      _
    $region11: #{tpu_custom_call.1} parent=1 // pred_check_branch
      %31 = sbr.rel (0) target = $region13
    $region12: #{tpu_custom_call.1} parent=1 // pred_region
      %32 = dma.done [#allocation4], 512
    $region13: #{tpu_custom_call.1} parent=1 // pred_fallthru
      _
    // Predicated region
    $region14: #{tpu_custom_call.1} parent=1 // pred_check
      _
    $region15: #{tpu_custom_call.1} parent=1 // pred_check_branch
      %34 = sbr.rel (0) target = $region17
    $region16: #{tpu_custom_call.1} parent=1 // pred_region
      %35 = dma.done [#allocation7], 1024
    $region17: #{tpu_custom_call.1} parent=1 // pred_fallthru
      _
    %p36 = scmp.eq.s32.totalorder 0, 0
    // Predicated region
    $region18: #{tpu_custom_call.1} parent=1 // pred_check
      %p37 = pneg %p36
    $region19: #{tpu_custom_call.1} parent=1 // pred_check_branch
      %39 = sbr.rel (%p37) target = $region21
    $region20: #{tpu_custom_call.1} parent=1 // pred_region
      %vm40 = vcmask 130048
      %41 = vst.msk [vmem:[#allocation2] sm:$0xff] %vm40, 0.0
      %42 = vst.msk [vmem:[#allocation2 + $0x8] sm:$0xff] %vm40, 0.0
    $region21: #{tpu_custom_call.1} parent=1 // pred_fallthru
      _
    %v43 = vld [vmem:[#allocation3] sm:$0xff]
    %v44 = vld [vmem:[#allocation3 + $0x8] sm:$0xff]
    %v45 = vld [vmem:[#allocation3 + $0x10] sm:$0xff]
    %v46 = vld [vmem:[#allocation3 + $0x18] sm:$0xff]
    %v47 = vld [vmem:[#allocation6] sm:$0xff]
    %v48 = vld [vmem:[#allocation6 + $0x8] sm:$0xff]
    %v49 = vld [vmem:[#allocation6 + $0x10] sm:$0xff]
    %v50 = vld [vmem:[#allocation6 + $0x18] sm:$0xff]
    %v51 = vld [vmem:[#allocation6 + $0x20] sm:$0xff]
    %v52 = vld [vmem:[#allocation6 + $0x28] sm:$0xff]
    %v53 = vld [vmem:[#allocation6 + $0x30] sm:$0xff]
    %v54 = vld [vmem:[#allocation6 + $0x38] sm:$0xff]
    %v55 = vrot.slane %v43, 4
    %v56 = vadd.f32 %v43, %v55
    %v57 = vrot.slane %v56, 2
    %v58 = vadd.f32 %v56, %v57
    %v59 = vrot.slane %v58, 1
    %v60 = vadd.f32 %v58, %v59
    %v61 = vrot.slane %v44, 4
    %v62 = vadd.f32 %v44, %v61
    %v63 = vrot.slane %v62, 2
    %v64 = vadd.f32 %v62, %v63
    %v65 = vrot.slane %v64, 1
    %v66 = vadd.f32 %v64, %v65
    %v67 = vrot.slane %v45, 4
    %v68 = vadd.f32 %v45, %v67
    %v69 = vrot.slane %v68, 2
    %v70 = vadd.f32 %v68, %v69
    %v71 = vrot.slane %v70, 1
    %v72 = vadd.f32 %v70, %v71
    %v73 = vrot.slane %v46, 4
    %v74 = vadd.f32 %v46, %v73
    %v75 = vrot.slane %v74, 2
    %v76 = vadd.f32 %v74, %v75
    %v77 = vrot.slane %v76, 1
    %v78 = vadd.f32 %v76, %v77
    %v79 = vrcp.pop 8.0
    %v80 = vmul.f32 %v60, %v79
    %v81 = vmul.f32 %v66, %v79
    %v82 = vmul.f32 %v72, %v79
    %v83 = vmul.f32 %v78, %v79
    %v84 = vsub.f32 %v43, %v80
    %v85 = vsub.f32 %v44, %v81
    %v86 = vsub.f32 %v45, %v82
    %v87 = vsub.f32 %v46, %v83
    %v88 = vrot.slane %v47, 4
    %v89 = vadd.f32 %v47, %v88
    %v90 = vrot.slane %v89, 2
    %v91 = vadd.f32 %v89, %v90
    %v92 = vrot.slane %v91, 1
    %v93 = vadd.f32 %v91, %v92
    %v94 = vrot.slane %v48, 4
    %v95 = vadd.f32 %v48, %v94
    %v96 = vrot.slane %v95, 2
    %v97 = vadd.f32 %v95, %v96
    %v98 = vrot.slane %v97, 1
    %v99 = vadd.f32 %v97, %v98
    %v100 = vrot.slane %v49, 4
    %v101 = vadd.f32 %v49, %v100
    %v102 = vrot.slane %v101, 2
    %v103 = vadd.f32 %v101, %v102
    %v104 = vrot.slane %v103, 1
    %v105 = vadd.f32 %v103, %v104
    %v106 = vrot.slane %v50, 4
    %v107 = vadd.f32 %v50, %v106
    %v108 = vrot.slane %v107, 2
    %v109 = vadd.f32 %v107, %v108
    %v110 = vrot.slane %v109, 1
    %v111 = vadd.f32 %v109, %v110
    %v112 = vrot.slane %v51, 4
    %v113 = vadd.f32 %v51, %v112
    %v114 = vrot.slane %v113, 2
    %v115 = vadd.f32 %v113, %v114
    %v116 = vrot.slane %v115, 1
    %v117 = vadd.f32 %v115, %v116
    %v118 = vrot.slane %v52, 4
    %v119 = vadd.f32 %v52, %v118
    %v120 = vrot.slane %v119, 2
    %v121 = vadd.f32 %v119, %v120
    %v122 = vrot.slane %v121, 1
    %v123 = vadd.f32 %v121, %v122
    %v124 = vrot.slane %v53, 4
    %v125 = vadd.f32 %v53, %v124
    %v126 = vrot.slane %v125, 2
    %v127 = vadd.f32 %v125, %v126
    %v128 = vrot.slane %v127, 1
    %v129 = vadd.f32 %v127, %v128
    %v130 = vrot.slane %v54, 4
    %v131 = vadd.f32 %v54, %v130
    %v132 = vrot.slane %v131, 2
    %v133 = vadd.f32 %v131, %v132
    %v134 = vrot.slane %v133, 1
    %v135 = vadd.f32 %v133, %v134
    %v136 = vmul.f32 %v93, %v79
    %v137 = vmul.f32 %v99, %v79
    %v138 = vmul.f32 %v105, %v79
    %v139 = vmul.f32 %v111, %v79
    %v140 = vmul.f32 %v117, %v79
    %v141 = vmul.f32 %v123, %v79
    %v142 = vmul.f32 %v129, %v79
    %v143 = vmul.f32 %v135, %v79
    %v144 = vsub.f32 %v47, %v136
    %v145 = vsub.f32 %v48, %v137
    %v146 = vsub.f32 %v49, %v138
    %v147 = vsub.f32 %v50, %v139
    %v148 = vsub.f32 %v51, %v140
    %v149 = vsub.f32 %v52, %v141
    %v150 = vsub.f32 %v53, %v142
    %v151 = vsub.f32 %v54, %v143
    %v152 = vld [vmem:[#allocation2] sm:$0xff]
    %v153 = vld [vmem:[#allocation2 + $0x8] sm:$0xff]
    %154 = vmatprep.subr.mxu0 %v85
    %155 = vmatpush1.xpose.msra.mxu0 %v84
    %156 = vmatprep.subr.mxu0 %v145
    %157 = vmatpush1.xpose.msra.mxu0 %v144
    %158 = vmatprep.subr.mxu0 0.0
    %159 = vmatpush1.xpose.msra.mxu0 0.0
    %160 = vmatprep.subr.mxu0 0.0
    %161 = vmatpush1.xpose.msra.mxu0 0.0
    %162 = vmatprep.subr.mxu0 0.0
    %163 = vmatpush1.xpose.msra.mxu0 0.0
    %164 = vmatprep.subr.mxu0 0.0
    %165 = vmatpush1.xpose.msra.mxu0 0.0
    %166 = vmatprep.subr.mxu0 0.0
    %167 = vmatpush1.xpose.msra.mxu0 0.0
    %168 = vmatprep.subr.mxu0 0.0
    %169 = vmatpush1.xpose.msra.mxu0 0.0
    %170 = vmatprep.subr.mxu0 0.0
    %171 = vmatpush1.xpose.msra.mxu0 0.0
    %172 = vmatprep.subr.mxu0 0.0
    %173 = vmatpush1.xpose.msra.mxu0 0.0
    %174 = vmatprep.subr.mxu0 0.0
    %175 = vmatpush1.xpose.msra.mxu0 0.0
    %176 = vmatprep.subr.mxu0 0.0
    %177 = vmatpush1.xpose.msra.mxu0 0.0
    %178 = vmatprep.subr.mxu0 0.0
    %179 = vmatpush1.xpose.msra.mxu0 0.0
    %180 = vmatprep.subr.mxu0 0.0
    %181 = vmatpush1.xpose.msra.mxu0 0.0
    %182 = vmatprep.subr.mxu0 0.0
    %183 = vmatpush1.xpose.msra.mxu0 0.0
    %184 = vmatprep.subr.mxu0 0.0
    %185 = vmatpush1.xpose.msra.mxu0 0.0
    %186 = vmatprep.subr.mxu0 0.0
    %187 = vmatpush1.xpose.msra.mxu0 0.0
    %188 = vmatprep.subr.mxu0 0.0
    %189 = vmatpush1.xpose.msra.mxu0 0.0
    %190 = vmatprep.subr.mxu0 0.0
    %191 = vmatpush1.xpose.msra.mxu0 0.0
    %192 = vmatprep.subr.mxu0 0.0
    %193 = vmatpush1.xpose.msra.mxu0 0.0
    %194 = vmatprep.subr.mxu0 0.0
    %195 = vmatpush1.xpose.msra.mxu0 0.0
    %196 = vmatprep.subr.mxu0 0.0
    %197 = vmatpush1.xpose.msra.mxu0 0.0
    %198 = vmatprep.subr.mxu0 0.0
    %199 = vmatpush1.xpose.msra.mxu0 0.0
    %200 = vmatprep.subr.mxu0 0.0
    %201 = vmatpush1.xpose.msra.mxu0 0.0
    %202 = vmatprep.subr.mxu0 0.0
    %203 = vmatpush1.xpose.msra.mxu0 0.0
    %204 = vmatprep.subr.mxu0 0.0
    %205 = vmatpush1.xpose.msra.mxu0 0.0
    %206 = vmatprep.subr.mxu0 0.0
    %207 = vmatpush1.xpose.msra.mxu0 0.0
    %208 = vmatprep.subr.mxu0 0.0
    %209 = vmatpush1.xpose.msra.mxu0 0.0
    %210 = vmatprep.subr.mxu0 0.0
    %211 = vmatpush1.xpose.msra.mxu0 0.0
    %212 = vmatprep.subr.mxu0 0.0
    %213 = vmatpush1.xpose.msra.mxu0 0.0
    %214 = vmatprep.subr.mxu0 0.0
    %215 = vmatpush1.xpose.msra.mxu0 0.0
    %216 = vmatprep.subr.mxu0 0.0
    %217 = vmatpush1.xpose.msra.mxu0 0.0
    %218 = vmatprep.mubr.f32.mxu0 %v85
    %219 = vmatmul.mubr.f32.gmra.mrb[0].mxu0 %v84
    %v220 = vpop.f32.mrb[0].mxu0
    %v221 = vadd.f32 0.0, %v220
    %v222 = vpop.f32.mrb[0].mxu0
    %223 = vmatprep.mubr.f32.mxu0 %v145
    %224 = vmatmul.mubr.f32.gmra.mrb[0].mxu0 %v144
    %v225 = vpop.f32.mrb[0].mxu0
    %v226 = vadd.f32 0.0, %v225
    %v227 = vpop.f32.mrb[0].mxu0
    %228 = vdwg.mxu0
    %229 = vmatprep.subr.mxu0 %v87
    %230 = vmatpush1.xpose.msra.mxu0 %v86
    %231 = vmatprep.subr.mxu0 %v147
    %232 = vmatpush1.xpose.msra.mxu0 %v146
    %233 = vmatprep.subr.mxu0 0.0
    %234 = vmatpush1.xpose.msra.mxu0 0.0
    %235 = vmatprep.subr.mxu0 0.0
    %236 = vmatpush1.xpose.msra.mxu0 0.0
    %237 = vmatprep.subr.mxu0 0.0
    %238 = vmatpush1.xpose.msra.mxu0 0.0
    %239 = vmatprep.subr.mxu0 0.0
    %240 = vmatpush1.xpose.msra.mxu0 0.0
    %241 = vmatprep.subr.mxu0 0.0
    %242 = vmatpush1.xpose.msra.mxu0 0.0
    %243 = vmatprep.subr.mxu0 0.0
    %244 = vmatpush1.xpose.msra.mxu0 0.0
    %245 = vmatprep.subr.mxu0 0.0
    %246 = vmatpush1.xpose.msra.mxu0 0.0
    %247 = vmatprep.subr.mxu0 0.0
    %248 = vmatpush1.xpose.msra.mxu0 0.0
    %249 = vmatprep.subr.mxu0 0.0
    %250 = vmatpush1.xpose.msra.mxu0 0.0
    %251 = vmatprep.subr.mxu0 0.0
    %252 = vmatpush1.xpose.msra.mxu0 0.0
    %253 = vmatprep.subr.mxu0 0.0
    %254 = vmatpush1.xpose.msra.mxu0 0.0
    %255 = vmatprep.subr.mxu0 0.0
    %256 = vmatpush1.xpose.msra.mxu0 0.0
    %257 = vmatprep.subr.mxu0 0.0
    %258 = vmatpush1.xpose.msra.mxu0 0.0
    %259 = vmatprep.subr.mxu0 0.0
    %260 = vmatpush1.xpose.msra.mxu0 0.0
    %261 = vmatprep.subr.mxu0 0.0
    %262 = vmatpush1.xpose.msra.mxu0 0.0
    %263 = vmatprep.subr.mxu0 0.0
    %264 = vmatpush1.xpose.msra.mxu0 0.0
    %265 = vmatprep.subr.mxu0 0.0
    %266 = vmatpush1.xpose.msra.mxu0 0.0
    %267 = vmatprep.subr.mxu0 0.0
    %268 = vmatpush1.xpose.msra.mxu0 0.0
    %269 = vmatprep.subr.mxu0 0.0
    %270 = vmatpush1.xpose.msra.mxu0 0.0
    %271 = vmatprep.subr.mxu0 0.0
    %272 = vmatpush1.xpose.msra.mxu0 0.0
    %273 = vmatprep.subr.mxu0 0.0
    %274 = vmatpush1.xpose.msra.mxu0 0.0
    %275 = vmatprep.subr.mxu0 0.0
    %276 = vmatpush1.xpose.msra.mxu0 0.0
    %277 = vmatprep.subr.mxu0 0.0
    %278 = vmatpush1.xpose.msra.mxu0 0.0
    %279 = vmatprep.subr.mxu0 0.0
    %280 = vmatpush1.xpose.msra.mxu0 0.0
    %281 = vmatprep.subr.mxu0 0.0
    %282 = vmatpush1.xpose.msra.mxu0 0.0
    %283 = vmatprep.subr.mxu0 0.0
    %284 = vmatpush1.xpose.msra.mxu0 0.0
    %285 = vmatprep.subr.mxu0 0.0
    %286 = vmatpush1.xpose.msra.mxu0 0.0
    %287 = vmatprep.subr.mxu0 0.0
    %288 = vmatpush1.xpose.msra.mxu0 0.0
    %289 = vmatprep.subr.mxu0 0.0
    %290 = vmatpush1.xpose.msra.mxu0 0.0
    %291 = vmatprep.subr.mxu0 0.0
    %292 = vmatpush1.xpose.msra.mxu0 0.0
    %293 = vmatprep.mubr.f32.mxu0 %v87
    %294 = vmatmul.mubr.f32.gmra.mrb[0].mxu0 %v86
    %v295 = vpop.f32.mrb[0].mxu0
    %v296 = vadd.f32 %v221, %v295
    %v297 = vpop.f32.mrb[0].mxu0
    %298 = vmatprep.mubr.f32.mxu0 %v147
    %299 = vmatmul.mubr.f32.gmra.mrb[0].mxu0 %v146
    %v300 = vpop.f32.mrb[0].mxu0
    %v301 = vadd.f32 %v226, %v300
    %v302 = vpop.f32.mrb[0].mxu0
    %303 = vdwg.mxu0
    %304 = vmatprep.subr.mxu0 0.0
    %305 = vmatpush1.xpose.msra.mxu0 0.0
    %306 = vmatprep.subr.mxu0 %v149
    %307 = vmatpush1.xpose.msra.mxu0 %v148
    %308 = vmatprep.subr.mxu0 0.0
    %309 = vmatpush1.xpose.msra.mxu0 0.0
    %310 = vmatprep.subr.mxu0 0.0
    %311 = vmatpush1.xpose.msra.mxu0 0.0
    %312 = vmatprep.subr.mxu0 0.0
    %313 = vmatpush1.xpose.msra.mxu0 0.0
    %314 = vmatprep.subr.mxu0 0.0
    %315 = vmatpush1.xpose.msra.mxu0 0.0
    %316 = vmatprep.subr.mxu0 0.0
    %317 = vmatpush1.xpose.msra.mxu0 0.0
    %318 = vmatprep.subr.mxu0 0.0
    %319 = vmatpush1.xpose.msra.mxu0 0.0
    %320 = vmatprep.subr.mxu0 0.0
    %321 = vmatpush1.xpose.msra.mxu0 0.0
    %322 = vmatprep.subr.mxu0 0.0
    %323 = vmatpush1.xpose.msra.mxu0 0.0
    %324 = vmatprep.subr.mxu0 0.0
    %325 = vmatpush1.xpose.msra.mxu0 0.0
    %326 = vmatprep.subr.mxu0 0.0
    %327 = vmatpush1.xpose.msra.mxu0 0.0
    %328 = vmatprep.subr.mxu0 0.0
    %329 = vmatpush1.xpose.msra.mxu0 0.0
    %330 = vmatprep.subr.mxu0 0.0
    %331 = vmatpush1.xpose.msra.mxu0 0.0
    %332 = vmatprep.subr.mxu0 0.0
    %333 = vmatpush1.xpose.msra.mxu0 0.0
    %334 = vmatprep.subr.mxu0 0.0
    %335 = vmatpush1.xpose.msra.mxu0 0.0
    %336 = vmatprep.subr.mxu0 0.0
    %337 = vmatpush1.xpose.msra.mxu0 0.0
    %338 = vmatprep.subr.mxu0 0.0
    %339 = vmatpush1.xpose.msra.mxu0 0.0
    %340 = vmatprep.subr.mxu0 0.0
    %341 = vmatpush1.xpose.msra.mxu0 0.0
    %342 = vmatprep.subr.mxu0 0.0
    %343 = vmatpush1.xpose.msra.mxu0 0.0
    %344 = vmatprep.subr.mxu0 0.0
    %345 = vmatpush1.xpose.msra.mxu0 0.0
    %346 = vmatprep.subr.mxu0 0.0
    %347 = vmatpush1.xpose.msra.mxu0 0.0
    %348 = vmatprep.subr.mxu0 0.0
    %349 = vmatpush1.xpose.msra.mxu0 0.0
    %350 = vmatprep.subr.mxu0 0.0
    %351 = vmatpush1.xpose.msra.mxu0 0.0
    %352 = vmatprep.subr.mxu0 0.0
    %353 = vmatpush1.xpose.msra.mxu0 0.0
    %354 = vmatprep.subr.mxu0 0.0
    %355 = vmatpush1.xpose.msra.mxu0 0.0
    %356 = vmatprep.subr.mxu0 0.0
    %357 = vmatpush1.xpose.msra.mxu0 0.0
    %358 = vmatprep.subr.mxu0 0.0
    %359 = vmatpush1.xpose.msra.mxu0 0.0
    %360 = vmatprep.subr.mxu0 0.0
    %361 = vmatpush1.xpose.msra.mxu0 0.0
    %362 = vmatprep.subr.mxu0 0.0
    %363 = vmatpush1.xpose.msra.mxu0 0.0
    %364 = vmatprep.subr.mxu0 0.0
    %365 = vmatpush1.xpose.msra.mxu0 0.0
    %366 = vmatprep.subr.mxu0 0.0
    %367 = vmatpush1.xpose.msra.mxu0 0.0
    %368 = vmatprep.mubr.f32.mxu0 0.0
    %369 = vmatmul.mubr.f32.gmra.mrb[0].mxu0 0.0
    %v370 = vpop.f32.mrb[0].mxu0
    %v371 = vadd.f32 %v296, %v370
    %v372 = vpop.f32.mrb[0].mxu0
    %373 = vmatprep.mubr.f32.mxu0 %v149
    %374 = vmatmul.mubr.f32.gmra.mrb[0].mxu0 %v148
    %v375 = vpop.f32.mrb[0].mxu0
    %v376 = vadd.f32 %v301, %v375
    %v377 = vpop.f32.mrb[0].mxu0
    %378 = vdwg.mxu0
    %379 = vmatprep.subr.mxu0 0.0
    %380 = vmatpush1.xpose.msra.mxu0 0.0
    %381 = vmatprep.subr.mxu0 %v151
    %382 = vmatpush1.xpose.msra.mxu0 %v150
    %383 = vmatprep.subr.mxu0 0.0
    %384 = vmatpush1.xpose.msra.mxu0 0.0
    %385 = vmatprep.subr.mxu0 0.0
    %386 = vmatpush1.xpose.msra.mxu0 0.0
    %387 = vmatprep.subr.mxu0 0.0
    %388 = vmatpush1.xpose.msra.mxu0 0.0
    %389 = vmatprep.subr.mxu0 0.0
    %390 = vmatpush1.xpose.msra.mxu0 0.0
    %391 = vmatprep.subr.mxu0 0.0
    %392 = vmatpush1.xpose.msra.mxu0 0.0
    %393 = vmatprep.subr.mxu0 0.0
    %394 = vmatpush1.xpose.msra.mxu0 0.0
    %395 = vmatprep.subr.mxu0 0.0
    %396 = vmatpush1.xpose.msra.mxu0 0.0
    %397 = vmatprep.subr.mxu0 0.0
    %398 = vmatpush1.xpose.msra.mxu0 0.0
    %399 = vmatprep.subr.mxu0 0.0
    %400 = vmatpush1.xpose.msra.mxu0 0.0
    %401 = vmatprep.subr.mxu0 0.0
    %402 = vmatpush1.xpose.msra.mxu0 0.0
    %403 = vmatprep.subr.mxu0 0.0
    %404 = vmatpush1.xpose.msra.mxu0 0.0
    %405 = vmatprep.subr.mxu0 0.0
    %406 = vmatpush1.xpose.msra.mxu0 0.0
    %407 = vmatprep.subr.mxu0 0.0
    %408 = vmatpush1.xpose.msra.mxu0 0.0
    %409 = vmatprep.subr.mxu0 0.0
    %410 = vmatpush1.xpose.msra.mxu0 0.0
    %411 = vmatprep.subr.mxu0 0.0
    %412 = vmatpush1.xpose.msra.mxu0 0.0
    %413 = vmatprep.subr.mxu0 0.0
    %414 = vmatpush1.xpose.msra.mxu0 0.0
    %415 = vmatprep.subr.mxu0 0.0
    %416 = vmatpush1.xpose.msra.mxu0 0.0
    %417 = vmatprep.subr.mxu0 0.0
    %418 = vmatpush1.xpose.msra.mxu0 0.0
    %419 = vmatprep.subr.mxu0 0.0
    %420 = vmatpush1.xpose.msra.mxu0 0.0
    %421 = vmatprep.subr.mxu0 0.0
    %422 = vmatpush1.xpose.msra.mxu0 0.0
    %423 = vmatprep.subr.mxu0 0.0
    %424 = vmatpush1.xpose.msra.mxu0 0.0
    %425 = vmatprep.subr.mxu0 0.0
    %426 = vmatpush1.xpose.msra.mxu0 0.0
    %427 = vmatprep.subr.mxu0 0.0
    %428 = vmatpush1.xpose.msra.mxu0 0.0
    %429 = vmatprep.subr.mxu0 0.0
    %430 = vmatpush1.xpose.msra.mxu0 0.0
    %431 = vmatprep.subr.mxu0 0.0
    %432 = vmatpush1.xpose.msra.mxu0 0.0
    %433 = vmatprep.subr.mxu0 0.0
    %434 = vmatpush1.xpose.msra.mxu0 0.0
    %435 = vmatprep.subr.mxu0 0.0
    %436 = vmatpush1.xpose.msra.mxu0 0.0
    %437 = vmatprep.subr.mxu0 0.0
    %438 = vmatpush1.xpose.msra.mxu0 0.0
    %439 = vmatprep.subr.mxu0 0.0
    %440 = vmatpush1.xpose.msra.mxu0 0.0
    %441 = vmatprep.subr.mxu0 0.0
    %442 = vmatpush1.xpose.msra.mxu0 0.0
    %443 = vmatprep.mubr.f32.mxu0 0.0
    %444 = vmatmul.mubr.f32.gmra.mrb[0].mxu0 0.0
    %v445 = vpop.f32.mrb[0].mxu0
    %v446 = vadd.f32 %v371, %v445
    %v447 = vpop.f32.mrb[0].mxu0
    %448 = vmatprep.mubr.f32.mxu0 %v151
    %449 = vmatmul.mubr.f32.gmra.mrb[0].mxu0 %v150
    %v450 = vpop.f32.mrb[0].mxu0
    %v451 = vadd.f32 %v376, %v450
    %v452 = vpop.f32.mrb[0].mxu0
    %453 = vdwg.mxu0
    %v454 = vadd.f32 %v152, %v446
    %v455 = vadd.f32 %v153, %v451
    %vm456 = vcmask 130048
    %457 = vst.msk [vmem:[#allocation2] sm:$0xff] %vm456, %v454
    %458 = vst.msk [vmem:[#allocation2 + $0x8] sm:$0xff] %vm456, %v455
    // Predicated region
    $region22: #{tpu_custom_call.1} parent=1 // pred_check
      %p459 = pneg %p36
    $region23: #{tpu_custom_call.1} parent=1 // pred_check_branch
      %461 = sbr.rel (%p459) target = $region25
    $region24: #{tpu_custom_call.1} parent=1 // pred_region
      %v462 = vld [vmem:[#allocation2] sm:$0xff]
      %v463 = vld [vmem:[#allocation2 + $0x8] sm:$0xff]
      %465 = vrot.lane.b32.xlu0 %v463, 120
      %v466 = vpop.permute.xlu0 %465
      %v468 = vmul.f32 %v462, %v466
      %vm469 = vcmask 64512
      %v470 = vsel %vm469, %v468, 0.0
      %471 = vadd.xlane.f32.xlu0 %v470
      %v472 = vpop.xlane.xlu0 %471
      %v473 = vrot.slane %v472, 4
      %v474 = vadd.f32 %v472, %v473
      %v475 = vrot.slane %v474, 2
      %v476 = vadd.f32 %v474, %v475
      %v477 = vrot.slane %v476, 1
      %v478 = vadd.f32 %v476, %v477
      %s479 = vtos %v478
      %v480 = vmul.f32 %v462, %v462
      %v481 = vsel %vm469, %v480, 0.0
      %482 = vadd.xlane.f32.xlu0 %v481
      %v483 = vpop.xlane.xlu0 %482
      %v484 = vrot.slane %v483, 4
      %v485 = vadd.f32 %v483, %v484
      %v486 = vrot.slane %v485, 2
      %v487 = vadd.f32 %v485, %v486
      %v488 = vrot.slane %v487, 1
      %v489 = vadd.f32 %v487, %v488
      %s490 = vtos %v489
      %v491 = vmul.f32 %v463, %v463
      %493 = vrot.lane.b32.xlu0 %v491, 120
      %v494 = vpop.permute.xlu0 %493
      %v496 = vsel %vm469, %v494, 0.0
      %497 = vadd.xlane.f32.xlu0 %v496
      %v498 = vpop.xlane.xlu0 %497
      %v499 = vrot.slane %v498, 4
      %v500 = vadd.f32 %v498, %v499
      %v501 = vrot.slane %v500, 2
      %v502 = vadd.f32 %v500, %v501
      %v503 = vrot.slane %v502, 1
      %v504 = vadd.f32 %v502, %v503
      %s505 = vtos %v504
      %v506 = vstv %s490
      %v507 = vrsqrt.pop %v506
      %v508 = vmul.f32 %v506, %v507
      %vm509 = vcmp.eq.f32.partialorder %v506, inf
      %v510 = vsel %vm509, %v506, %v508
      %vm511 = vcmp.eq.f32.partialorder %v506, 0.0
      %v512 = vand.u32 %v506, 2147483648
      %v513 = vsel %vm511, %v512, %v510
      %s514 = vtos %v513
      %v515 = vstv %s505
      %v516 = vrsqrt.pop %v515
      %v517 = vmul.f32 %v515, %v516
      %vm518 = vcmp.eq.f32.partialorder %v515, inf
      %v519 = vsel %vm518, %v515, %v517
      %vm520 = vcmp.eq.f32.partialorder %v515, 0.0
      %v521 = vand.u32 %v515, 2147483648
      %v522 = vsel %vm520, %v521, %v519
      %s523 = vtos %v522
      %s524 = smul.f32 %s514, %s523
      %v525 = vstv %s524
      %v526 = vrcp.pop %v525
      %s527 = vtos %v526
      %s528 = smul.f32 %s479, %s527
      %v529 = vstv %s528
      %vm530 = vcmask 0
      %531 = vst.msk [vmem:[#allocation8] sm:$0x1] %vm530, %v529
    $region25: #{tpu_custom_call.1} parent=1 // pred_fallthru
      _
    // Predicated region
    $region26: #{tpu_custom_call.1} parent=1 // pred_check
      _
    $region27: #{tpu_custom_call.1} parent=1 // pred_check_branch
      %533 = sbr.rel (0) target = $region29
    $region28: #{tpu_custom_call.1} parent=1 // pred_region
      %s535 = ssub.s32 16, 16
      %536 = vsyncadd [#allocation5], %s535
      %s538 = sshll.u32 [#allocation8], 4
      %s539 = int_to_ptr.vmem [resolvable:$true] %s538
      %541 = dma.vmem_to_hbm [thread:$0]  %s539, 16, %s2, [#allocation5]
    $region29: #{tpu_custom_call.1} parent=1 // pred_fallthru
      _
    // Predicated region
    $region30: #{tpu_custom_call.1} parent=1 // pred_check
      _
    $region31: #{tpu_custom_call.1} parent=1 // pred_check_branch
      %543 = sbr.rel (0) target = $region33
    $region32: #{tpu_custom_call.1} parent=1 // pred_region
      %544 = dma.done [#allocation5], 16
    $region33: #{tpu_custom_call.1} parent=1 // pred_fallthru
      _
    %545 = vsyncpa [#allocation4], 1
    %546 = vsyncpa [#allocation7], 1
    %547 = vsyncpa [#allocation5], 1

</llo_original>
